<compile_context>
chip_gen: v7x
topology: tpu7x:2x2x1
jax: 0.10.0
libtpu: 0.0.40
codegen_flags: <defaults>
</compile_context>

<pallas_src>
import math

import jax
import jax.numpy as jnp
from jax import lax
from jax.experimental import pallas as pl
from jax.experimental.pallas import tpu as pltpu


def _round_up(x, m):
    return (x + m - 1) // m * m


def _conv_bias_kernel(lhs_ref, rhs_ref, bias_ref, out_ref):
    # lhs_ref:  (block_m, K)           bf16 VMEM  im2col patches
    # rhs_ref:  (K, C_out_total)       bf16 VMEM  reshaped conv weights
    # bias_ref: (1, C_out_total)       f32  VMEM
    # out_ref:  (block_m, C_out_total) f32  VMEM
    acc = jnp.dot(lhs_ref[...], rhs_ref[...],
                  preferred_element_type=jnp.float32)
    out_ref[...] = (acc + bias_ref[...]).astype(out_ref.dtype)


def upsample_conv2d_pallas(x_nchw, weight, bias, *, kernel_size, padding,
                           scale_factor, operand_dtype=jnp.bfloat16):
    """x_nchw: (N, C_in, H, W); weight: (C_out*scale^2, C_in, KH, KW);
    bias: (C_out*scale^2,). stride=1, dilation=1, groups=1.

    operand_dtype: MXU operand dtype (default bf16 = native MXU rate and half
    the DMA bytes on v5e/v6e/v7x). Accumulation and bias stay f32.
    """
    n, c_in, h, w = x_nchw.shape
    kh, kw = kernel_size
    ph, pw = padding
    c_out_total = weight.shape[0]
    s = scale_factor
    c_out = c_out_total // (s * s)

    h_out = h + 2 * ph - (kh - 1)
    w_out = w + 2 * pw - (kw - 1)
    m = n * h_out * w_out
    k = kh * kw * c_in

    # ---- glue: im2col (NCHW -> NHWC, zero-pad, shifted-window patches) ----
    x_nhwc = jnp.transpose(x_nchw, (0, 2, 3, 1)).astype(operand_dtype)
    x_pad = jnp.pad(x_nhwc, ((0, 0), (ph, ph), (pw, pw), (0, 0)))
    patches = jnp.concatenate(
        [x_pad[:, i:i + h_out, j:j + w_out, :]
         for i in range(kh) for j in range(kw)], axis=-1)
    lhs = patches.reshape(m, k)                       # (M, K), bf16, unpadded K

    # Conv weights as a (K, C_out_total) matrix with the same (i, j, ci) row
    # order as the patch columns. bf16 operands; f32 bias handled in-kernel.
    rhs = jnp.transpose(weight, (2, 3, 1, 0)).reshape(k, c_out_total)
    rhs = rhs.astype(operand_dtype)
    bias2d = bias.reshape(1, c_out_total).astype(jnp.float32)

    # ---- M tiling: fixed block sizes (multiples of 16 for bf16 sublane
    # packing), M padded up to a multiple; >=2 grid steps whenever M allows
    # it so the input/output pipeline actually overlaps. ----
    if m >= 8192:
        block_m = 1024
    elif m >= 2048:
        block_m = 512
    else:
        block_m = 256
    m_pad = _round_up(m, block_m)
    if m_pad != m:
        lhs = jnp.pad(lhs, ((0, m_pad - m), (0, 0)))  # single pad, fusible
    grid_m = m_pad // block_m

    itemsize = jnp.dtype(operand_dtype).itemsize
    cost = pl.CostEstimate(
        flops=2 * m_pad * k * c_out_total,
        transcendentals=0,
        bytes_accessed=(m_pad * k * itemsize           # lhs read
                        + k * c_out_total * itemsize   # rhs read
                        + c_out_total * 4              # bias read
                        + m_pad * c_out_total * 4))    # out write

    conv_cols = pl.pallas_call(
        _conv_bias_kernel,
        out_shape=jax.ShapeDtypeStruct((m_pad, c_out_total), jnp.float32),
        grid_spec=pltpu.PrefetchScalarGridSpec(
            num_scalar_prefetch=0,
            grid=(grid_m,),
            in_specs=[
                # Minor dims use the full array extent; Mosaic pads lanes in
                # VMEM, HBM stays unpadded.
                pl.BlockSpec((block_m, k), lambda i: (i, 0)),
                # Grid-invariant weight tile. For very large Cin/Cout layers
                # (v7x 64 MiB VMEM), single-buffer it or tile C_out over a
                # second grid axis; at these sizes it is KB-scale.
                pl.BlockSpec((k, c_out_total), lambda i: (0, 0)),
                pl.BlockSpec((1, c_out_total), lambda i: (0, 0)),
            ],
            out_specs=pl.BlockSpec((block_m, c_out_total), lambda i: (i, 0)),
        ),
        compiler_params=pltpu.CompilerParams(
            # On v7x with large M, switch this axis to pltpu.CORE_PARALLEL so
            # both TensorCores share the M strips; at toy M the split is pure
            # overhead, so keep plain "parallel" here.
            dimension_semantics=("parallel",),
            # Allow XLA to fuse the im2col producer (transpose/pad/slices/
            # concat) into the pallas input DMA instead of materializing the
            # blown-up patch buffer in HBM.
            allow_input_fusion=[True, False, False],
            # Headroom on every gen: v5e's default scoped limit is only
            # 16 MiB; stays within v7x's 64 MiB physical VMEM.
            vmem_limit_bytes=48 * 1024 * 1024),
        cost_estimate=cost,
    )(lhs, rhs, bias2d)

    # ---- glue: drop M padding, pixel_shuffle (one XLA transpose), to NCHW --
    # TODO(synk): fusing the pixel_shuffle writeback fully in-kernel needs a
    # channel-minor -> interleaved-spatial relayout with no cheap Mosaic
    # lowering at these tile sizes; it stays one XLA transpose on the output.
    conv = conv_cols[:m].reshape(n, h_out, w_out, c_out, s, s)
    y = jnp.transpose(conv, (0, 3, 1, 4, 2, 5))        # (N, C, Ho, s, Wo, s)
    return y.reshape(n, c_out, h_out * s, w_out * s)


def _reference(x_nchw, weight, bias, *, padding, scale_factor):
    """Pure-JAX reference: conv2d + pixel_shuffle (validation only)."""
    conv = lax.conv_general_dilated(
        x_nchw, weight, window_strides=(1, 1),
        padding=[(padding[0], padding[0]), (padding[1], padding[1])],
        dimension_numbers=("NCHW", "OIHW", "NCHW"),
        precision=lax.Precision.HIGHEST)
    conv = conv + bias[None, :, None, None]
    n, c_tot, h, w = conv.shape
    s = scale_factor
    c_out = c_tot // (s * s)
    y = conv.reshape(n, c_out, s, s, h, w)
    y = jnp.transpose(y, (0, 1, 4, 2, 5, 3))
    return y.reshape(n, c_out, h * s, w * s)


if __name__ == "__main__":
    # Module hyperparameters (stride=1, dilation=1, groups=1)
    in_channels, out_channels = 4, 8
    kernel_size = (3, 3)
    padding = (1, 1)
    scale_factor = 2
    N, H, W = 2, 16, 16

    key = jax.random.PRNGKey(0)
    k_x, k_w, k_b = jax.random.split(key, 3)

    # Deterministic init matching reset_parameters: U(-stdv, stdv),
    # stdv = 1/sqrt(in_channels * kh * kw)
    n_fan = in_channels * kernel_size[0] * kernel_size[1]
    stdv = 1.0 / math.sqrt(n_fan)
    c_out_total = out_channels * scale_factor * scale_factor
    weight = jax.random.uniform(
        k_w, (c_out_total, in_channels, *kernel_size),
        minval=-stdv, maxval=stdv, dtype=jnp.float32)
    bias = jax.random.uniform(
        k_b, (c_out_total,), minval=-stdv, maxval=stdv, dtype=jnp.float32)
    x = jax.random.normal(k_x, (N, in_channels, H, W), dtype=jnp.float32)

    out = upsample_conv2d_pallas(
        x, weight, bias, kernel_size=kernel_size, padding=padding,
        scale_factor=scale_factor)
    out = jax.block_until_ready(out)

    # Reference with operands rounded to bf16 (matching the kernel's MXU
    # operand dtype) but f32 accumulation and f32 bias, so parity stays tight.
    x_ref = x.astype(jnp.bfloat16).astype(jnp.float32)
    w_ref = weight.astype(jnp.bfloat16).astype(jnp.float32)
    ref = _reference(x_ref, w_ref, bias, padding=padding,
                     scale_factor=scale_factor)

    assert out.shape == (N, out_channels, H * scale_factor, W * scale_factor)
    assert jnp.allclose(out, ref, atol=1e-4, rtol=1e-4), "mismatch vs reference"

    print("KERNEL_OK")
</pallas_src>

<mosaic_0001>
module attributes {stable_mosaic.version = 11 : i64} {
  func.func @_conv_bias_kernel(%arg0: i32, %arg1: memref<256x36xbf16, #tpu.memory_space<vmem>>, %arg2: memref<36x32xbf16, #tpu.memory_space<vmem>>, %arg3: memref<1x32xf32, #tpu.memory_space<vmem>>, %arg4: memref<256x32xf32, #tpu.memory_space<vmem>>) attributes {dimension_semantics = [#tpu.dimension_semantics<parallel>], iteration_bounds = array<i64: 2>, scalar_prefetch = 0 : i64, scratch_operands = 0 : i64, tpu.core_type = #tpu.core_type<tc>, window_params = [{transform_indices = @transform_0, window_bounds = array<i64: 256, 36>}, {pipeline_mode = #tpu.pipeline_mode<synchronous>, transform_indices = @transform_1, window_bounds = array<i64: 36, 32>}, {pipeline_mode = #tpu.pipeline_mode<synchronous>, transform_indices = @transform_2, window_bounds = array<i64: 1, 32>}, {transform_indices = @transform_3, window_bounds = array<i64: 256, 32>}]} {
    %c0 = arith.constant 0 : index
    %c0_0 = arith.constant 0 : index
    %0 = vector.load %arg1[%c0, %c0_0] : memref<256x36xbf16, #tpu.memory_space<vmem>>, vector<256x36xbf16>
    %c0_1 = arith.constant 0 : index
    %c0_2 = arith.constant 0 : index
    %1 = vector.load %arg2[%c0_1, %c0_2] : memref<36x32xbf16, #tpu.memory_space<vmem>>, vector<36x32xbf16>
    %cst = arith.constant dense<0.000000e+00> : vector<256x32xf32>
    %2 = tpu.matmul %0, %1, %cst {dimension_numbers = #tpu.dot_dimension_numbers<[1], [0], [0], [1], [0, 0, 1, 1], [], []>} : vector<256x36xbf16>, vector<36x32xbf16>, vector<256x32xf32> -> vector<256x32xf32>
    %c0_3 = arith.constant 0 : index
    %c0_4 = arith.constant 0 : index
    %3 = vector.load %arg3[%c0_3, %c0_4] : memref<1x32xf32, #tpu.memory_space<vmem>>, vector<1x32xf32>
    %4 = vector.broadcast %3 : vector<1x32xf32> to vector<256x32xf32>
    %5 = arith.addf %2, %4 : vector<256x32xf32>
    %c0_5 = arith.constant 0 : index
    %c0_6 = arith.constant 0 : index
    %6 = vector.load %arg4[%c0_5, %c0_6] : memref<256x32xf32, #tpu.memory_space<vmem>>, vector<256x32xf32>
    tpu.vector_store %arg4[%c0_5, %c0_6], %5 {strides = array<i32>} : memref<256x32xf32, #tpu.memory_space<vmem>>, vector<256x32xf32>,
    return
  }
  func.func @transform_0(%arg0: i32) -> (i32, i32) {
    %c0_i32 = arith.constant 0 : i32
    %c0_i32_0 = arith.constant 0 : i32
    return %arg0, %c0_i32 : i32, i32
  }
  func.func @transform_1(%arg0: i32) -> (i32, i32) {
    %c0_i32 = arith.constant 0 : i32
    %c0_i32_0 = arith.constant 0 : i32
    %c0_i32_1 = arith.constant 0 : i32
    return %c0_i32, %c0_i32_0 : i32, i32
  }
  func.func @transform_2(%arg0: i32) -> (i32, i32) {
    %c0_i32 = arith.constant 0 : i32
    %c0_i32_0 = arith.constant 0 : i32
    %c0_i32_1 = arith.constant 0 : i32
    return %c0_i32, %c0_i32_0 : i32, i32
  }
  func.func @transform_3(%arg0: i32) -> (i32, i32) {
    %c0_i32 = arith.constant 0 : i32
    %c0_i32_0 = arith.constant 0 : i32
    return %arg0, %c0_i32 : i32, i32
  }
}

</mosaic_0001>

<llo_original>
// kernel: tpu_custom_call.1
$region0: #{tpu_custom_call.1}
  #allocation0 [shape = 'u32[]', space=smem, size = 0x4, offset = 0x4, fixed_abs, tag = 'smem constant byte address 0x4 - core index']
  #allocation1 [shape = 'u32[144,128]{1,0:T(1,128)}', space=vmem, size = 0x12000, scoped, tag = 'internal scratch']
  %s0 = inlined_call_operand.vmem [shape: bf16[512,36], index: 0, kind: input, shape index: {}]
  %s1 = inlined_call_operand.vmem [shape: bf16[36,32], index: 1, kind: input, shape index: {}]
  %s2 = inlined_call_operand.vmem [shape: f32[1,32], index: 2, kind: input, shape index: {}]
  %s3 = inlined_call_operand.vmem [shape: f32[512,32], index: 3, kind: output, shape index: {}]
  %s4 = sld [smem:[#allocation0]]
  $region45: #{tpu_custom_call.1} parent=0
    _
  %s6 = ssub.s32 1, %s4
  %s7 = scalar_select 0, %s6, %s4
  loop: start=0, step=1, limit=4
  $region2: #{tpu_custom_call.1} parent=0 // loop_pre_header
    _
  $region3: #{tpu_custom_call.1} parent=0 // loop_header
    %s9 = sphi 0, %s13
    %p10 = scmp.ge.s32.totalorder %s9, 4
    %s19 = sphi 0, %s21
    %s22 = sphi 0, %s19
    %s23 = sphi 0, %s22
    %s39 = sphi 0, %s23
    %s43 = sphi 0, %s43
    %s45 = sphi 0, %s43
    %s46 = sphi 0, %s45
    %s60 = sphi 0, %s46
    %s64 = sphi 0, %s64
    %s66 = sphi 0, %s64
    %s67 = sphi 0, %s66
    %s81 = sphi 0, %s67
    %s87 = sphi 0, %s89
    %s90 = sphi 0, %s87
    %s91 = sphi 0, %s90
    %s107 = sphi 0, %s91
  $region4: #{tpu_custom_call.1} parent=0 // loop_header_branch
    %12 = sbr.rel (%p10) target = $region8
  $region5: #{tpu_custom_call.1} parent=0 // loop_body
    %s14 = ssub.s32 %s9, 1
    %s15 = ssub.s32 %s9, 2
    %s16 = sadd.s32 %s9, 1
    %s17 = ssub.s32 %s9, %s16
    %p18 = scmp.eq.s32.totalorder %s17, 0
    %s20 = sadd.s32 %s19, 1
    %s21 = scalar_select %p18, %s19, %s20
    %p24 = pneg %p18
    %p25 = scmp.eq.s32.totalorder %s9, 1
    %p26 = por %p24, %p25
    %p27 = scmp.ne.s32.totalorder %s19, %s22
    %p28 = scmp.eq.s32.totalorder %s9, 0
    %p29 = por %p27, %p28
    %p30 = scmp.ne.s32.totalorder %s19, %s22
    %p31 = scmp.eq.s32.totalorder %s14, 1
    %p32 = por %p30, %p31
    %p33 = scmp.ne.s32.totalorder %s22, %s23
    %p34 = scmp.eq.s32.totalorder %s14, 0
    %p35 = por %p33, %p34
    %p36 = scmp.ne.s32.totalorder %s22, %s23
    %p37 = scmp.eq.s32.totalorder %s15, 1
    %p38 = por %p36, %p37
    %p40 = scmp.ne.s32.totalorder %s23, %s39
    %p41 = scmp.eq.s32.totalorder %s15, 0
    %p42 = por %p40, %p41
    %s44 = sadd.s32 %s43, 1
    %p47 = scmp.eq.s32.totalorder %s9, 1
    %p48 = scmp.ne.s32.totalorder %s43, %s45
    %p49 = scmp.eq.s32.totalorder %s9, 0
    %p50 = por %p48, %p49
    %p51 = scmp.ne.s32.totalorder %s43, %s45
    %p52 = scmp.eq.s32.totalorder %s14, 1
    %p53 = por %p51, %p52
    %p54 = scmp.ne.s32.totalorder %s45, %s46
    %p55 = scmp.eq.s32.totalorder %s14, 0
    %p56 = por %p54, %p55
    %p57 = scmp.ne.s32.totalorder %s45, %s46
    %p58 = scmp.eq.s32.totalorder %s15, 1
    %p59 = por %p57, %p58
    %p61 = scmp.ne.s32.totalorder %s46, %s60
    %p62 = scmp.eq.s32.totalorder %s15, 0
    %p63 = por %p61, %p62
    %s65 = sadd.s32 %s64, 1
    %p68 = scmp.eq.s32.totalorder %s9, 1
    %p69 = scmp.ne.s32.totalorder %s64, %s66
    %p70 = scmp.eq.s32.totalorder %s9, 0
    %p71 = por %p69, %p70
    %p72 = scmp.ne.s32.totalorder %s64, %s66
    %p73 = scmp.eq.s32.totalorder %s14, 1
    %p74 = por %p72, %p73
    %p75 = scmp.ne.s32.totalorder %s66, %s67
    %p76 = scmp.eq.s32.totalorder %s14, 0
    %p77 = por %p75, %p76
    %p78 = scmp.ne.s32.totalorder %s66, %s67
    %p79 = scmp.eq.s32.totalorder %s15, 1
    %p80 = por %p78, %p79
    %p82 = scmp.ne.s32.totalorder %s67, %s81
    %p83 = scmp.eq.s32.totalorder %s15, 0
    %p84 = por %p82, %p83
    %s85 = ssub.s32 %s9, %s16
    %p86 = scmp.eq.s32.totalorder %s85, 0
    %s88 = sadd.s32 %s87, 1
    %s89 = scalar_select %p86, %s87, %s88
    %p92 = pneg %p86
    %p93 = scmp.eq.s32.totalorder %s9, 1
    %p94 = por %p92, %p93
    %p95 = scmp.ne.s32.totalorder %s87, %s90
    %p96 = scmp.eq.s32.totalorder %s9, 0
    %p97 = por %p95, %p96
    %p98 = scmp.ne.s32.totalorder %s87, %s90
    %p99 = scmp.eq.s32.totalorder %s14, 1
    %p100 = por %p98, %p99
    %p101 = scmp.ne.s32.totalorder %s90, %s91
    %p102 = scmp.eq.s32.totalorder %s14, 0
    %p103 = por %p101, %p102
    %p104 = scmp.ne.s32.totalorder %s90, %s91
    %p105 = scmp.eq.s32.totalorder %s15, 1
    %p106 = por %p104, %p105
    %p108 = scmp.ne.s32.totalorder %s91, %s107
    %p109 = scmp.eq.s32.totalorder %s15, 0
    %p110 = por %p108, %p109
    %p111 = scmp.le.s32.totalorder 1, %s9
    %p112 = scmp.lt.s32.totalorder %s9, 3
    %p113 = pnand %p111, %p112
    %p114 = pneg %p113
    // Predicated region
    $region9: #{tpu_custom_call.1} parent=5 // pred_check
      _
    $region10: #{tpu_custom_call.1} parent=5 // pred_check_branch
      %116 = sbr.rel (%p113) target = $region12
    $region11: #{tpu_custom_call.1} parent=5 // pred_region
      %s117 = ssub.s32 %s9, 1
      // Predicated region
      $region13: #{tpu_custom_call.1} parent=11 // pred_check
        %p118 = pneg %p56
      $region14: #{tpu_custom_call.1} parent=11 // pred_check_branch
        %120 = sbr.rel (%p118) target = $region16
      $region15: #{tpu_custom_call.1} parent=11 // pred_region
        _
      $region16: #{tpu_custom_call.1} parent=11 // pred_fallthru
        _
      // Predicated region
      $region17: #{tpu_custom_call.1} parent=11 // pred_check
        %p121 = pneg %p77
      $region18: #{tpu_custom_call.1} parent=11 // pred_check_branch
        %123 = sbr.rel (%p121) target = $region20
      $region19: #{tpu_custom_call.1} parent=11 // pred_region
        _
      $region20: #{tpu_custom_call.1} parent=11 // pred_fallthru
        _
    $region12: #{tpu_custom_call.1} parent=5 // pred_fallthru
      _
    %p124 = scmp.lt.s32.totalorder %s9, 2
    // Predicated region
    $region21: #{tpu_custom_call.1} parent=5 // pred_check
      %p125 = pneg %p124
    $region22: #{tpu_custom_call.1} parent=5 // pred_check_branch
      %127 = sbr.rel (%p125) target = $region24
    $region23: #{tpu_custom_call.1} parent=5 // pred_region
      // Predicated region
      $region25: #{tpu_custom_call.1} parent=23 // pred_check
        %p128 = pneg %p29
      $region26: #{tpu_custom_call.1} parent=23 // pred_check_branch
        %130 = sbr.rel (%p128) target = $region28
      $region27: #{tpu_custom_call.1} parent=23 // pred_region
        %s131 = smul.u32 32, %s9
        %p132 = scmp.lt.s32.totalorder %s131, 63
        %s133 = scalar_select %p132, %s131, 63
        %s134 = smul.addr %s133, 4
        %s135 = scalar_lea.vmem %s0, %s134
        %s136 = smul.u32 32, %s9
      $region28: #{tpu_custom_call.1} parent=23 // pred_fallthru
        _
    $region24: #{tpu_custom_call.1} parent=5 // pred_fallthru
      _
    %p137 = scmp.le.s32.totalorder 1, %s9
    %p138 = scmp.lt.s32.totalorder %s9, 3
    %p139 = pnand %p137, %p138
    %p140 = pneg %p139
    // Predicated region
    $region29: #{tpu_custom_call.1} parent=5 // pred_check
      _
    $region30: #{tpu_custom_call.1} parent=5 // pred_check_branch
      %142 = sbr.rel (%p139) target = $region32
    $region31: #{tpu_custom_call.1} parent=5 // pred_region
      %s143 = ssub.s32 %s9, 1
      %s144 = smul.u32 32, %s14
      %p145 = scmp.lt.s32.totalorder %s144, 63
      %s146 = scalar_select %p145, %s144, 63
      %s147 = smul.addr %s146, 4
      %s148 = scalar_lea.vmem %s0, %s147
      %p149 = pneg %p35
      %p150 = pneg %p32
      %p151 = pneg %p56
      %p152 = pneg %p53
      %p153 = pneg %p77
      %p154 = pneg %p74
      %p155 = pneg %p103
      %p156 = pneg %p100
      %s157 = smul.u32 32, %s14
      %p158 = scmp.lt.s32.totalorder %s157, 63
      %s159 = scalar_select %p158, %s157, 63
      %s160 = smul.addr %s159, 8
      %s161 = scalar_lea.vmem %s3, %s160
      %s162 = smul.u32 32, %s14
      %p163 = scmp.lt.s32.totalorder %s162, 63
      %s164 = scalar_select %p163, %s162, 63
      %s165 = smul.addr %s164, 4
      %s166 = scalar_lea.vmem %s0, %s165
      %s167 = smul.u32 32, %s14
      %s168 = smul.u32 32, %s14
      %p169 = scmp.lt.s32.totalorder %s168, 63
      %s170 = scalar_select %p169, %s168, 63
      %s171 = smul.addr %s170, 8
      %s172 = scalar_lea.vmem %s3, %s171
      %s173 = smul.u32 32, %s14
      %v175 = vld [vmem:[%s166] sm:$0xf]
      %v176 = vld [vmem:[%s166 + $0x4] sm:$0xf]
      %v177 = vld [vmem:[%s166 + $0x8] sm:$0xf]
      %v178 = vld [vmem:[%s166 + $0xc] sm:$0xf]
      %v179 = vld [vmem:[%s166 + $0x10] sm:$0xf]
      %v180 = vld [vmem:[%s166 + $0x14] sm:$0xf]
      %v181 = vld [vmem:[%s166 + $0x18] sm:$0xf]
      %v182 = vld [vmem:[%s166 + $0x1c] sm:$0xf]
      %v183 = vld [vmem:[%s166 + $0x20] sm:$0xf]
      %v184 = vld [vmem:[%s166 + $0x24] sm:$0xf]
      %v185 = vld [vmem:[%s166 + $0x28] sm:$0xf]
      %v186 = vld [vmem:[%s166 + $0x2c] sm:$0xf]
      %v187 = vld [vmem:[%s166 + $0x30] sm:$0xf]
      %v188 = vld [vmem:[%s166 + $0x34] sm:$0xf]
      %v189 = vld [vmem:[%s166 + $0x38] sm:$0xf]
      %v190 = vld [vmem:[%s166 + $0x3c] sm:$0xf]
      %v191 = vld [vmem:[%s166 + $0x40] sm:$0xf]
      %v192 = vld [vmem:[%s166 + $0x44] sm:$0xf]
      %v193 = vld [vmem:[%s166 + $0x48] sm:$0xf]
      %v194 = vld [vmem:[%s166 + $0x4c] sm:$0xf]
      %v195 = vld [vmem:[%s166 + $0x50] sm:$0xf]
      %v196 = vld [vmem:[%s166 + $0x54] sm:$0xf]
      %v197 = vld [vmem:[%s166 + $0x58] sm:$0xf]
      %v198 = vld [vmem:[%s166 + $0x5c] sm:$0xf]
      %v199 = vld [vmem:[%s166 + $0x60] sm:$0xf]
      %v200 = vld [vmem:[%s166 + $0x64] sm:$0xf]
      %v201 = vld [vmem:[%s166 + $0x68] sm:$0xf]
      %v202 = vld [vmem:[%s166 + $0x6c] sm:$0xf]
      %v203 = vld [vmem:[%s166 + $0x70] sm:$0xf]
      %v204 = vld [vmem:[%s166 + $0x74] sm:$0xf]
      %v205 = vld [vmem:[%s166 + $0x78] sm:$0xf]
      %v206 = vld [vmem:[%s166 + $0x7c] sm:$0xf]
      %v207 = vld [vmem:[%s1] sm:$0xf]
      %v208 = vld [vmem:[%s1 + $0x4] sm:$0xf]
      %v209 = vld [vmem:[%s1 + $0x8] sm:$0xf]
      %v210 = vld [vmem:[%s1 + $0xc] sm:$0xf]
      %v211 = vld [vmem:[%s1 + $0x10] sm:$0x3]
      %v212 = vld [vmem:[%s2] sm:$0x1]
      %v214 = vlaneseq
      %v215 = vshrl.u32 %v214, 7
      %v216 = vsub.s32 0, %v215
      %v217 = vrot.slane %v212, %v216
      %v251 = vunpack.c.l.b16 %v175
      %v252 = vunpack.c.l.b16 %v176
      %v253 = vunpack.c.l.b16 %v177
      %v254 = vunpack.c.l.b16 %v178
      %v255 = vunpack.c.l.b16 %v179
      %v256 = vunpack.c.l.b16 %v180
      %v257 = vunpack.c.l.b16 %v181
      %v258 = vunpack.c.l.b16 %v182
      %v259 = vunpack.c.l.b16 %v183
      %v260 = vunpack.c.l.b16 %v184
      %v261 = vunpack.c.l.b16 %v185
      %v262 = vunpack.c.l.b16 %v186
      %v263 = vunpack.c.l.b16 %v187
      %v264 = vunpack.c.l.b16 %v188
      %v265 = vunpack.c.l.b16 %v189
      %v266 = vunpack.c.l.b16 %v190
      %v267 = vunpack.c.l.b16 %v191
      %v268 = vunpack.c.l.b16 %v192
      %v269 = vunpack.c.l.b16 %v193
      %v270 = vunpack.c.l.b16 %v194
      %v271 = vunpack.c.l.b16 %v195
      %v272 = vunpack.c.l.b16 %v196
      %v273 = vunpack.c.l.b16 %v197
      %v274 = vunpack.c.l.b16 %v198
      %v275 = vunpack.c.l.b16 %v199
      %v276 = vunpack.c.l.b16 %v200
      %v277 = vunpack.c.l.b16 %v201
      %v278 = vunpack.c.l.b16 %v202
      %v279 = vunpack.c.l.b16 %v203
      %v280 = vunpack.c.l.b16 %v204
      %v281 = vunpack.c.l.b16 %v205
      %v282 = vunpack.c.l.b16 %v206
      %v283 = vpack.c.b16 %v252, %v251
      %v284 = vpack.c.b16 %v254, %v253
      %v285 = vpack.c.b16 %v256, %v255
      %v286 = vpack.c.b16 %v258, %v257
      %v287 = vpack.c.b16 %v260, %v259
      %v288 = vpack.c.b16 %v262, %v261
      %v289 = vpack.c.b16 %v264, %v263
      %v290 = vpack.c.b16 %v266, %v265
      %v291 = vpack.c.b16 %v268, %v267
      %v292 = vpack.c.b16 %v270, %v269
      %v293 = vpack.c.b16 %v272, %v271
      %v294 = vpack.c.b16 %v274, %v273
      %v295 = vpack.c.b16 %v276, %v275
      %v296 = vpack.c.b16 %v278, %v277
      %v297 = vpack.c.b16 %v280, %v279
      %v298 = vpack.c.b16 %v282, %v281
      %v304 = vunpack.c.l.b16 %v207
      %v305 = vunpack.c.l.b16 %v208
      %v306 = vunpack.c.l.b16 %v209
      %v307 = vunpack.c.l.b16 %v210
      %v308 = vunpack.c.l.b16 %v211
      %v309 = vpack.c.b16 %v305, %v304
      %v310 = vpack.c.b16 %v307, %v306
      %v311 = vpack.c.b16 %v308, %v308
      %vm314 = vcmask 293888
      %v316 = vsel %vm314, %v283, 0
      %v319 = vsel %vm314, %v284, 0
      %v322 = vsel %vm314, %v285, 0
      %v325 = vsel %vm314, %v286, 0
      %v328 = vsel %vm314, %v287, 0
      %v331 = vsel %vm314, %v288, 0
      %v334 = vsel %vm314, %v289, 0
      %v337 = vsel %vm314, %v290, 0
      %v340 = vsel %vm314, %v291, 0
      %v343 = vsel %vm314, %v292, 0
      %v346 = vsel %vm314, %v293, 0
      %v349 = vsel %vm314, %v294, 0
      %v352 = vsel %vm314, %v295, 0
      %v355 = vsel %vm314, %v296, 0
      %v358 = vsel %vm314, %v297, 0
      %v361 = vsel %vm314, %v298, 0
      %vm363 = vcmask 1041408
      %v365 = vsel %vm363, %v311, 0
      %367 = vmatprep.subr.bf16.mxu0 0
      %368 = vmatpush1.bf16.msra.mxu0 %v309
      %369 = vmatprep.subr.bf16.mxu0 0
      %370 = vmatpush1.bf16.msra.mxu0 %v310
      %371 = vmatprep.subr.bf16.mxu0 0
      %372 = vmatpush1.bf16.msra.mxu0 %v365
      %373 = vmatprep.subr.bf16.mxu0 0
      %374 = vmatpush1.bf16.msra.mxu0 0
      %375 = vmatprep.subr.bf16.mxu0 0
      %376 = vmatpush1.bf16.msra.mxu0 0
      %377 = vmatprep.subr.bf16.mxu0 0
      %378 = vmatpush1.bf16.msra.mxu0 0
      %379 = vmatprep.subr.bf16.mxu0 0
      %380 = vmatpush1.bf16.msra.mxu0 0
      %381 = vmatprep.subr.bf16.mxu0 0
      %382 = vmatpush1.bf16.msra.mxu0 0
      %383 = vmatprep.subr.bf16.mxu0 0
      %384 = vmatpush1.bf16.msra.mxu0 0
      %385 = vmatprep.subr.bf16.mxu0 0
      %386 = vmatpush1.bf16.msra.mxu0 0
      %387 = vmatprep.subr.bf16.mxu0 0
      %388 = vmatpush1.bf16.msra.mxu0 0
      %389 = vmatprep.subr.bf16.mxu0 0
      %390 = vmatpush1.bf16.msra.mxu0 0
      %391 = vmatprep.subr.bf16.mxu0 0
      %392 = vmatpush1.bf16.msra.mxu0 0
      %393 = vmatprep.subr.bf16.mxu0 0
      %394 = vmatpush1.bf16.msra.mxu0 0
      %395 = vmatprep.subr.bf16.mxu0 0
      %396 = vmatpush1.bf16.msra.mxu0 0
      %397 = vmatprep.subr.bf16.mxu0 0
      %398 = vmatpush1.bf16.msra.mxu0 0
      %399 = vmatprep.mubr.bf16.mxu0 0
      %400 = vmatmul.mubr.bf16.gmra.mrb[0].mxu0 %v316
      %v401 = vpop.f32.mrb[0].mxu0
      %v402 = vadd.f32 %v217, %v401
      %v403 = vpop.f32.mrb[0].mxu0
      %v404 = vpop.f32.mrb[0].mxu0
      %v405 = vadd.f32 %v217, %v404
      %v406 = vpop.f32.mrb[0].mxu0
      %407 = vmatprep.mubr.bf16.mxu0 0
      %408 = vmatmul.mubr.bf16.gmra.mrb[0].mxu0 %v319
      %v409 = vpop.f32.mrb[0].mxu0
      %v410 = vadd.f32 %v217, %v409
      %v411 = vpop.f32.mrb[0].mxu0
      %v412 = vpop.f32.mrb[0].mxu0
      %v413 = vadd.f32 %v217, %v412
      %v414 = vpop.f32.mrb[0].mxu0
      %415 = vmatprep.mubr.bf16.mxu0 0
      %416 = vmatmul.mubr.bf16.gmra.mrb[0].mxu0 %v322
      %v417 = vpop.f32.mrb[0].mxu0
      %v418 = vadd.f32 %v217, %v417
      %v419 = vpop.f32.mrb[0].mxu0
      %v420 = vpop.f32.mrb[0].mxu0
      %v421 = vadd.f32 %v217, %v420
      %v422 = vpop.f32.mrb[0].mxu0
      %423 = vmatprep.mubr.bf16.mxu0 0
      %424 = vmatmul.mubr.bf16.gmra.mrb[0].mxu0 %v325
      %v425 = vpop.f32.mrb[0].mxu0
      %v426 = vadd.f32 %v217, %v425
      %v427 = vpop.f32.mrb[0].mxu0
      %v428 = vpop.f32.mrb[0].mxu0
      %v429 = vadd.f32 %v217, %v428
      %v430 = vpop.f32.mrb[0].mxu0
      %431 = vmatprep.mubr.bf16.mxu0 0
      %432 = vmatmul.mubr.bf16.gmra.mrb[0].mxu0 %v328
      %v433 = vpop.f32.mrb[0].mxu0
      %v434 = vadd.f32 %v217, %v433
      %v435 = vpop.f32.mrb[0].mxu0
      %v436 = vpop.f32.mrb[0].mxu0
      %v437 = vadd.f32 %v217, %v436
      %v438 = vpop.f32.mrb[0].mxu0
      %439 = vmatprep.mubr.bf16.mxu0 0
      %440 = vmatmul.mubr.bf16.gmra.mrb[0].mxu0 %v331
      %v441 = vpop.f32.mrb[0].mxu0
      %v442 = vadd.f32 %v217, %v441
      %v443 = vpop.f32.mrb[0].mxu0
      %v444 = vpop.f32.mrb[0].mxu0
      %v445 = vadd.f32 %v217, %v444
      %v446 = vpop.f32.mrb[0].mxu0
      %447 = vmatprep.mubr.bf16.mxu0 0
      %448 = vmatmul.mubr.bf16.gmra.mrb[0].mxu0 %v334
      %v449 = vpop.f32.mrb[0].mxu0
      %v450 = vadd.f32 %v217, %v449
      %v451 = vpop.f32.mrb[0].mxu0
      %v452 = vpop.f32.mrb[0].mxu0
      %v453 = vadd.f32 %v217, %v452
      %v454 = vpop.f32.mrb[0].mxu0
      %455 = vmatprep.mubr.bf16.mxu0 0
      %456 = vmatmul.mubr.bf16.gmra.mrb[0].mxu0 %v337
      %v457 = vpop.f32.mrb[0].mxu0
      %v458 = vadd.f32 %v217, %v457
      %v459 = vpop.f32.mrb[0].mxu0
      %v460 = vpop.f32.mrb[0].mxu0
      %v461 = vadd.f32 %v217, %v460
      %v462 = vpop.f32.mrb[0].mxu0
      %463 = vmatprep.mubr.bf16.mxu0 0
      %464 = vmatmul.mubr.bf16.gmra.mrb[0].mxu0 %v340
      %v465 = vpop.f32.mrb[0].mxu0
      %v466 = vadd.f32 %v217, %v465
      %v467 = vpop.f32.mrb[0].mxu0
      %v468 = vpop.f32.mrb[0].mxu0
      %v469 = vadd.f32 %v217, %v468
      %v470 = vpop.f32.mrb[0].mxu0
      %471 = vmatprep.mubr.bf16.mxu0 0
      %472 = vmatmul.mubr.bf16.gmra.mrb[0].mxu0 %v343
      %v473 = vpop.f32.mrb[0].mxu0
      %v474 = vadd.f32 %v217, %v473
      %v475 = vpop.f32.mrb[0].mxu0
      %v476 = vpop.f32.mrb[0].mxu0
      %v477 = vadd.f32 %v217, %v476
      %v478 = vpop.f32.mrb[0].mxu0
      %479 = vmatprep.mubr.bf16.mxu0 0
      %480 = vmatmul.mubr.bf16.gmra.mrb[0].mxu0 %v346
      %v481 = vpop.f32.mrb[0].mxu0
      %v482 = vadd.f32 %v217, %v481
      %v483 = vpop.f32.mrb[0].mxu0
      %v484 = vpop.f32.mrb[0].mxu0
      %v485 = vadd.f32 %v217, %v484
      %v486 = vpop.f32.mrb[0].mxu0
      %487 = vmatprep.mubr.bf16.mxu0 0
      %488 = vmatmul.mubr.bf16.gmra.mrb[0].mxu0 %v349
      %v489 = vpop.f32.mrb[0].mxu0
      %v490 = vadd.f32 %v217, %v489
      %v491 = vpop.f32.mrb[0].mxu0
      %v492 = vpop.f32.mrb[0].mxu0
      %v493 = vadd.f32 %v217, %v492
      %v494 = vpop.f32.mrb[0].mxu0
      %495 = vmatprep.mubr.bf16.mxu0 0
      %496 = vmatmul.mubr.bf16.gmra.mrb[0].mxu0 %v352
      %v497 = vpop.f32.mrb[0].mxu0
      %v498 = vadd.f32 %v217, %v497
      %v499 = vpop.f32.mrb[0].mxu0
      %v500 = vpop.f32.mrb[0].mxu0
      %v501 = vadd.f32 %v217, %v500
      %v502 = vpop.f32.mrb[0].mxu0
      %503 = vmatprep.mubr.bf16.mxu0 0
      %504 = vmatmul.mubr.bf16.gmra.mrb[0].mxu0 %v355
      %v505 = vpop.f32.mrb[0].mxu0
      %v506 = vadd.f32 %v217, %v505
      %v507 = vpop.f32.mrb[0].mxu0
      %v508 = vpop.f32.mrb[0].mxu0
      %v509 = vadd.f32 %v217, %v508
      %v510 = vpop.f32.mrb[0].mxu0
      %511 = vmatprep.mubr.bf16.mxu0 0
      %512 = vmatmul.mubr.bf16.gmra.mrb[0].mxu0 %v358
      %v513 = vpop.f32.mrb[0].mxu0
      %v514 = vadd.f32 %v217, %v513
      %v515 = vpop.f32.mrb[0].mxu0
      %v516 = vpop.f32.mrb[0].mxu0
      %v517 = vadd.f32 %v217, %v516
      %v518 = vpop.f32.mrb[0].mxu0
      %519 = vmatprep.mubr.bf16.mxu0 0
      %520 = vmatmul.mubr.bf16.gmra.mrb[0].mxu0 %v361
      %v521 = vpop.f32.mrb[0].mxu0
      %v522 = vadd.f32 %v217, %v521
      %v523 = vpop.f32.mrb[0].mxu0
      %v524 = vpop.f32.mrb[0].mxu0
      %v525 = vadd.f32 %v217, %v524
      %v526 = vpop.f32.mrb[0].mxu0
      %527 = vdwg.mxu0
      %vm528 = vcmask 261120
      %529 = vst.msk [vmem:[%s172] sm:$0xff] %vm528, %v402
      %530 = vst.msk [vmem:[%s172 + $0x8] sm:$0xff] %vm528, %v405
      %531 = vst.msk [vmem:[%s172 + $0x10] sm:$0xff] %vm528, %v410
      %532 = vst.msk [vmem:[%s172 + $0x18] sm:$0xff] %vm528, %v413
      %533 = vst.msk [vmem:[%s172 + $0x20] sm:$0xff] %vm528, %v418
      %534 = vst.msk [vmem:[%s172 + $0x28] sm:$0xff] %vm528, %v421
      %535 = vst.msk [vmem:[%s172 + $0x30] sm:$0xff] %vm528, %v426
      %536 = vst.msk [vmem:[%s172 + $0x38] sm:$0xff] %vm528, %v429
      %537 = vst.msk [vmem:[%s172 + $0x40] sm:$0xff] %vm528, %v434
      %538 = vst.msk [vmem:[%s172 + $0x48] sm:$0xff] %vm528, %v437
      %539 = vst.msk [vmem:[%s172 + $0x50] sm:$0xff] %vm528, %v442
      %540 = vst.msk [vmem:[%s172 + $0x58] sm:$0xff] %vm528, %v445
      %541 = vst.msk [vmem:[%s172 + $0x60] sm:$0xff] %vm528, %v450
      %542 = vst.msk [vmem:[%s172 + $0x68] sm:$0xff] %vm528, %v453
      %543 = vst.msk [vmem:[%s172 + $0x70] sm:$0xff] %vm528, %v458
      %544 = vst.msk [vmem:[%s172 + $0x78] sm:$0xff] %vm528, %v461
      %545 = vst.msk [vmem:[%s172 + $0x80] sm:$0xff] %vm528, %v466
      %546 = vst.msk [vmem:[%s172 + $0x88] sm:$0xff] %vm528, %v469
      %547 = vst.msk [vmem:[%s172 + $0x90] sm:$0xff] %vm528, %v474
      %548 = vst.msk [vmem:[%s172 + $0x98] sm:$0xff] %vm528, %v477
      %549 = vst.msk [vmem:[%s172 + $0xa0] sm:$0xff] %vm528, %v482
      %550 = vst.msk [vmem:[%s172 + $0xa8] sm:$0xff] %vm528, %v485
      %551 = vst.msk [vmem:[%s172 + $0xb0] sm:$0xff] %vm528, %v490
      %552 = vst.msk [vmem:[%s172 + $0xb8] sm:$0xff] %vm528, %v493
      %553 = vst.msk [vmem:[%s172 + $0xc0] sm:$0xff] %vm528, %v498
      %554 = vst.msk [vmem:[%s172 + $0xc8] sm:$0xff] %vm528, %v501
      %555 = vst.msk [vmem:[%s172 + $0xd0] sm:$0xff] %vm528, %v506
      %556 = vst.msk [vmem:[%s172 + $0xd8] sm:$0xff] %vm528, %v509
      %557 = vst.msk [vmem:[%s172 + $0xe0] sm:$0xff] %vm528, %v514
      %558 = vst.msk [vmem:[%s172 + $0xe8] sm:$0xff] %vm528, %v517
      %559 = vst.msk [vmem:[%s172 + $0xf0] sm:$0xff] %vm528, %v522
      %560 = vst.msk [vmem:[%s172 + $0xf8] sm:$0xff] %vm528, %v525
      %s561 = smul.u32 32, %s14
      %p562 = scmp.lt.s32.totalorder %s561, 63
      %s563 = scalar_select %p562, %s561, 63
      %s564 = smul.addr %s563, 8
      %s565 = scalar_lea.vmem %s3, %s564
      // Predicated region
      $region33: #{tpu_custom_call.1} parent=31 // pred_check
        %p566 = pneg %p100
      $region34: #{tpu_custom_call.1} parent=31 // pred_check_branch
        %568 = sbr.rel (%p566) target = $region36
      $region35: #{tpu_custom_call.1} parent=31 // pred_region
        %s569 = smul.u32 32, %s14
      $region36: #{tpu_custom_call.1} parent=31 // pred_fallthru
        _
    $region32: #{tpu_custom_call.1} parent=5 // pred_fallthru
      _
    %p570 = scmp.le.s32.totalorder 2, %s9
    // Predicated region
    $region37: #{tpu_custom_call.1} parent=5 // pred_check
      %p571 = pneg %p570
    $region38: #{tpu_custom_call.1} parent=5 // pred_check_branch
      %573 = sbr.rel (%p571) target = $region40
    $region39: #{tpu_custom_call.1} parent=5 // pred_region
      %s574 = ssub.s32 %s9, 2
      // Predicated region
      $region41: #{tpu_custom_call.1} parent=39 // pred_check
        %p575 = pneg %p106
      $region42: #{tpu_custom_call.1} parent=39 // pred_check_branch
        %577 = sbr.rel (%p575) target = $region44
      $region43: #{tpu_custom_call.1} parent=39 // pred_region
        %s578 = smul.u32 32, %s15
        %p579 = scmp.lt.s32.totalorder %s578, 63
        %s580 = scalar_select %p579, %s578, 63
        %s581 = smul.addr %s580, 8
        %s582 = scalar_lea.vmem %s3, %s581
      $region44: #{tpu_custom_call.1} parent=39 // pred_fallthru
        _
    $region40: #{tpu_custom_call.1} parent=5 // pred_fallthru
      _
  $region6: #{tpu_custom_call.1} parent=0 // loop_footer
    %s13 = sadd.s32 1, %s9
  $region7: #{tpu_custom_call.1} parent=0 // loop_footer_branch
    %8 = sbr.rel target = $region3
  $region8: #{tpu_custom_call.1} parent=0 // loop_exit
    _

</llo_original>
